<compile_context>
chip_gen: v7x
topology: tpu7x:2x2x1
jax: 0.10.0
libtpu: 0.0.40
codegen_flags: <defaults>
</compile_context>

<pallas_src>
import jax
import jax.numpy as jnp
from jax import lax
from jax.experimental import pallas as pl
from jax.experimental.pallas import tpu as pltpu


def _cdiv(a, b):
    return (a + b - 1) // b


def _round_up(v, m):
    return _cdiv(v, m) * m


def _pad_to(a, axis, target):
    cur = a.shape[axis]
    if cur == target:
        return a
    pads = [(0, 0)] * a.ndim
    pads[axis] = (0, target - cur)
    return jnp.pad(a, pads)


def _residual_kernel(x_ref, w_ref, b_ref, r_ref, o_ref):
    k = pl.program_id(2)

    @pl.when(k == 0)
    def _():
        # Fold bias + residual into the accumulator init.  o_ref is the K-resident f32
        # accumulator (out index_map is k-invariant) -> no separate VMEM scratch, no
        # zero-fill, no last-step epilogue.
        o_ref[...] = b_ref[...] + r_ref[...].astype(jnp.float32)

    # x @ W.T without materializing a transpose: contract on axis 1 of both operands;
    # Mosaic drives the MXU with the transposed RHS natively (same pattern as q @ k.T in
    # flash attention).  If porting to a new Mosaic version, confirm with pl.lower_as_mlir
    # that no per-K-step transpose of the W tile is emitted.
    o_ref[...] += lax.dot_general(
        x_ref[...], w_ref[...],
        dimension_numbers=(((1,), (1,)), ((), ())),
        preferred_element_type=jnp.float32,
    )


def _xla_reference(x, weights, bias):
    """Plain-XLA expression of the module forward (also the small-problem fallback)."""
    size_in = x.shape[-1]
    size_out = weights.shape[0]
    if size_in > size_out:
        xt = x[:, :size_out]
    elif size_in < size_out:
        # TODO(synk): original torch F.pad(x, int) is malformed; interpreted as
        # zero-padding the last (feature) dim up to size_out.
        xt = jnp.pad(x, ((0, 0), (0, size_out - size_in)))
    else:
        xt = x
    y = jnp.dot(x, weights.T, precision=lax.Precision.HIGHEST,
                preferred_element_type=jnp.float32)
    return y + bias[None, :] + xt


def residual_layer(x, weights, bias, *, bm=None, bn=None, bk=None,
                   matmul_in_bf16=False, small_problem_fallback=True):
    """x: (batch, size_in); weights: (size_out, size_in); bias: (size_out,)."""
    x = jnp.asarray(x, jnp.float32)
    weights = jnp.asarray(weights, jnp.float32)
    bias = jnp.asarray(bias, jnp.float32)

    batch, size_in = x.shape
    size_out = weights.shape[0]
    assert weights.shape == (size_out, size_in)
    assert bias.shape == (size_out,)

    # Tiny problems: pallas_call fixed overhead dominates -> plain XLA fusion.
    if small_problem_fallback and (min(batch, size_in, size_out) < 128
                                   or 2 * batch * size_in * size_out < (1 << 22)):
        return _xla_reference(x, weights, bias)

    # ---- generation-aware tile / VMEM-limit selection -----------------------------
    try:
        vmem_phys = int(pltpu.get_tpu_info().vmem_capacity_bytes)
    except Exception:
        vmem_phys = 64 << 20                      # conservative (v7x-sized) default
    big_vmem = vmem_phys >= (100 << 20)           # v5e / v6e: 128 MiB physical VMEM
    if bm is None:
        bm = 512
    if bn is None:
        bn = 2048 if big_vmem else 1024           # v7x: 64 MiB physical -> smaller cap
    vmem_limit = (64 << 20) if big_vmem else (40 << 20)

    # Clamp to the problem (full-extent blocks are always layout-legal).
    bm = min(bm, batch)
    bn = min(bn, size_out)
    # Reduction axis: keep bk modest; take the full K when it is small enough so that no
    # K-padding copy is ever needed for moderate / unaligned K.
    if bk is None:
        bk = size_in if size_in <= 1024 else 512
    bk = min(bk, size_in)
    Kp = _round_up(size_in, bk)                   # K must be exact for the reduction

    # Make sure both TensorCores get work on v7x: if the (i, j) grid would be a single
    # block, split it in two (measured ~neutral on 1-TC v5e/v6e).
    if _cdiv(batch, bm) * _cdiv(size_out, bn) == 1:
        if batch >= 16:
            bm = _round_up(_cdiv(batch, 2), 8)
        elif size_out >= 256:
            bn = _round_up(_cdiv(size_out, 2), 128)

    # ---- operands ------------------------------------------------------------------
    # bf16 path: pre-cast in the wrapper so HBM arrays / DMA bytes are actually halved.
    mm_dtype = jnp.bfloat16 if matmul_in_bf16 else jnp.float32
    xp = _pad_to(x.astype(mm_dtype), 1, Kp)       # zero-pad K only (no-op when aligned)
    wp = _pad_to(weights.astype(mm_dtype), 1, Kp)
    bp = bias.reshape(1, size_out)

    # Residual operand. f32 common case (size_in >= size_out): alias the x buffer itself
    # (zero extra HBM); the kernel reads only its (i, j) tile, i.e. the leading size_out
    # feature columns.  In bf16 mode the residual is passed separately in f32 so the
    # epilogue precision matches torch's narrow(x).
    alias_ok = ((not matmul_in_bf16) and size_in >= size_out
                and (bn % 128 == 0 or bn == Kp))
    if alias_ok:
        rp = xp
    elif size_in > size_out:
        rp = x[:, :size_out]                      # torch.narrow(x, -1, 0, size_out)
    elif size_in < size_out:
        # TODO(synk): malformed torch F.pad(x, int) interpreted as zero-pad to size_out.
        rp = jnp.pad(x, ((0, 0), (0, size_out - size_in)))
    else:
        rp = x

    grid = (_cdiv(batch, bm), _cdiv(size_out, bn), Kp // bk)

    in_itemsize = 2 if matmul_in_bf16 else 4
    cost = pl.CostEstimate(
        flops=2 * batch * Kp * size_out,
        transcendentals=0,
        bytes_accessed=int(
            grid[1] * batch * Kp * in_itemsize        # x re-read once per N block
            + grid[0] * size_out * Kp * in_itemsize   # W re-read once per M block
            + size_out * 4                            # bias
            + batch * size_out * 4                    # residual read
            + batch * size_out * 4),                  # output write
    )

    out = pl.pallas_call(
        _residual_kernel,
        out_shape=jax.ShapeDtypeStruct((batch, size_out), jnp.float32),
        grid_spec=pltpu.PrefetchScalarGridSpec(
            num_scalar_prefetch=0,
            grid=grid,
            in_specs=[
                pl.BlockSpec((bm, bk), lambda i, j, k: (i, k)),   # x tile
                pl.BlockSpec((bn, bk), lambda i, j, k: (j, k)),   # W tile (PyTorch layout)
                pl.BlockSpec((1, bn),  lambda i, j, k: (0, j)),   # bias tile (k-invariant)
                pl.BlockSpec((bm, bn), lambda i, j, k: (i, j)),   # residual tile (k-invariant)
            ],
            out_specs=pl.BlockSpec((bm, bn), lambda i, j, k: (i, j)),
        ),
        compiler_params=pltpu.CompilerParams(
            dimension_semantics=("parallel", "parallel", "arbitrary"),
            vmem_limit_bytes=vmem_limit,
        ),
        cost_estimate=cost,
    )(xp, wp, bp, rp)

    return out


def _make_case(key, batch, size_in, size_out):
    kx, kw, kb = jax.random.split(key, 3)
    x = jax.random.normal(kx, (batch, size_in), dtype=jnp.float32)
    # Module __init__ uses zeros; use small random values so the matmul path is exercised.
    w = 0.1 * jax.random.normal(kw, (size_out, size_in), dtype=jnp.float32)
    b = 0.1 * jax.random.normal(kb, (size_out,), dtype=jnp.float32)
    return x, w, b


if __name__ == "__main__":
    key = jax.random.PRNGKey(0)
    k1, k2, k3, k4 = jax.random.split(key, 4)

    # 1) Small shapes consistent with the module: equal in/out (pure residual case).
    #    Force the Pallas path (fallback off) so the kernel itself is exercised.
    x, w, b = _make_case(k1, batch=8, size_in=32, size_out=32)
    out = jax.block_until_ready(
        residual_layer(x, w, b, small_problem_fallback=False))
    assert out.shape == (8, 32)
    assert jnp.allclose(out, _xla_reference(x, w, b), atol=1e-4, rtol=1e-4)
    # Automatic small-problem XLA fallback path.
    out_fb = jax.block_until_ready(residual_layer(x, w, b))
    assert jnp.allclose(out_fb, _xla_reference(x, w, b), atol=1e-5, rtol=1e-5)

    # 2) Narrow branch (size_in > size_out), Pallas path.
    x, w, b = _make_case(k2, batch=8, size_in=48, size_out=32)
    out = jax.block_until_ready(
        residual_layer(x, w, b, small_problem_fallback=False))
    assert jnp.allclose(out, _xla_reference(x, w, b), atol=1e-4, rtol=1e-4)

    # 3) Pad branch (size_in < size_out), Pallas path.
    x, w, b = _make_case(k3, batch=8, size_in=24, size_out=40)
    out = jax.block_until_ready(
        residual_layer(x, w, b, small_problem_fallback=False))
    assert jnp.allclose(out, _xla_reference(x, w, b), atol=1e-4, rtol=1e-4)

    # 4) Larger shapes exercising the (M, N, K) grid, the K-resident output accumulator,
    #    the aliased (copy-free) residual operand, and the 2-block megacore split.
    x, w, b = _make_case(k4, batch=512, size_in=1024, size_out=768)
    out = jax.block_until_ready(residual_layer(x, w, b))
    ref = _xla_reference(x, w, b)
    assert out.shape == (512, 768)
    assert jnp.allclose(out, ref, atol=2e-3, rtol=2e-3)

    # 5) bf16-matmul-input path (bf16 operands in HBM -> half the x/W DMA traffic);
    #    residual/bias epilogue stays f32, so tolerance is only matmul-rounding loose.
    out_bf16 = jax.block_until_ready(residual_layer(x, w, b, matmul_in_bf16=True))
    assert jnp.allclose(out_bf16, ref, atol=5e-2, rtol=5e-2)

    print("KERNEL_OK")
</pallas_src>

<mosaic_0001>
module attributes {stable_mosaic.version = 11 : i64} {
  func.func @_residual_kernel(%arg0: i32, %arg1: i32, %arg2: i32, %arg3: memref<8x32xf32, #tpu.memory_space<vmem>>, %arg4: memref<32x32xf32, #tpu.memory_space<vmem>>, %arg5: memref<1x32xf32, #tpu.memory_space<vmem>>, %arg6: memref<8x32xf32, #tpu.memory_space<vmem>>, %arg7: memref<8x32xf32, #tpu.memory_space<vmem>>) attributes {dimension_semantics = [#tpu.dimension_semantics<parallel>, #tpu.dimension_semantics<parallel>, #tpu.dimension_semantics<arbitrary>], iteration_bounds = array<i64: 1, 1, 1>, scalar_prefetch = 0 : i64, scratch_operands = 0 : i64, tpu.core_type = #tpu.core_type<tc>, window_params = [{transform_indices = @transform_0, window_bounds = array<i64: 8, 32>}, {transform_indices = @transform_1, window_bounds = array<i64: 32, 32>}, {transform_indices = @transform_2, window_bounds = array<i64: 1, 32>}, {transform_indices = @transform_3, window_bounds = array<i64: 8, 32>}, {transform_indices = @transform_4, window_bounds = array<i64: 8, 32>}]} {
    %c0_i32 = arith.constant 0 : i32
    %0 = arith.cmpi eq, %arg2, %c0_i32 : i32
    %1 = arith.extui %0 : i1 to i32
    %c0_i32_0 = arith.constant 0 : i32
    %2 = arith.cmpi ne, %1, %c0_i32_0 : i32
    scf.if %2 {
      %c0_8 = arith.constant 0 : index
      %c0_9 = arith.constant 0 : index
      %9 = vector.load %arg5[%c0_8, %c0_9] : memref<1x32xf32, #tpu.memory_space<vmem>>, vector<1x32xf32>
      %c0_10 = arith.constant 0 : index
      %c0_11 = arith.constant 0 : index
      %10 = vector.load %arg6[%c0_10, %c0_11] : memref<8x32xf32, #tpu.memory_space<vmem>>, vector<8x32xf32>
      %11 = vector.broadcast %9 : vector<1x32xf32> to vector<8x32xf32>
      %12 = arith.addf %11, %10 : vector<8x32xf32>
      %c0_12 = arith.constant 0 : index
      %c0_13 = arith.constant 0 : index
      %13 = vector.load %arg7[%c0_12, %c0_13] : memref<8x32xf32, #tpu.memory_space<vmem>>, vector<8x32xf32>
      tpu.vector_store %arg7[%c0_12, %c0_13], %12 {strides = array<i32>} : memref<8x32xf32, #tpu.memory_space<vmem>>, vector<8x32xf32>,
    } else {
    }
    %c0 = arith.constant 0 : index
    %c0_1 = arith.constant 0 : index
    %3 = vector.load %arg7[%c0, %c0_1] : memref<8x32xf32, #tpu.memory_space<vmem>>, vector<8x32xf32>
    %c0_2 = arith.constant 0 : index
    %c0_3 = arith.constant 0 : index
    %4 = vector.load %arg3[%c0_2, %c0_3] : memref<8x32xf32, #tpu.memory_space<vmem>>, vector<8x32xf32>
    %c0_4 = arith.constant 0 : index
    %c0_5 = arith.constant 0 : index
    %5 = vector.load %arg4[%c0_4, %c0_5] : memref<32x32xf32, #tpu.memory_space<vmem>>, vector<32x32xf32>
    %cst = arith.constant dense<0.000000e+00> : vector<8x32xf32>
    %6 = tpu.matmul %4, %5, %cst {dimension_numbers = #tpu.dot_dimension_numbers<[1], [1], [0], [0], [0, 0, 1, 0], [], []>} : vector<8x32xf32>, vector<32x32xf32>, vector<8x32xf32> -> vector<8x32xf32>
    %7 = arith.addf %3, %6 : vector<8x32xf32>
    %c0_6 = arith.constant 0 : index
    %c0_7 = arith.constant 0 : index
    %8 = vector.load %arg7[%c0_6, %c0_7] : memref<8x32xf32, #tpu.memory_space<vmem>>, vector<8x32xf32>
    tpu.vector_store %arg7[%c0_6, %c0_7], %7 {strides = array<i32>} : memref<8x32xf32, #tpu.memory_space<vmem>>, vector<8x32xf32>,
    return
  }
  func.func @transform_0(%arg0: i32, %arg1: i32, %arg2: i32) -> (i32, i32) {
    %c0_i32 = arith.constant 0 : i32
    return %arg0, %arg2 : i32, i32
  }
  func.func @transform_1(%arg0: i32, %arg1: i32, %arg2: i32) -> (i32, i32) {
    %c0_i32 = arith.constant 0 : i32
    return %arg1, %arg2 : i32, i32
  }
  func.func @transform_2(%arg0: i32, %arg1: i32, %arg2: i32) -> (i32, i32) {
    %c0_i32 = arith.constant 0 : i32
    %c0_i32_0 = arith.constant 0 : i32
    return %c0_i32, %arg1 : i32, i32
  }
  func.func @transform_3(%arg0: i32, %arg1: i32, %arg2: i32) -> (i32, i32) {
    %c0_i32 = arith.constant 0 : i32
    return %arg0, %arg1 : i32, i32
  }
  func.func @transform_4(%arg0: i32, %arg1: i32, %arg2: i32) -> (i32, i32) {
    %c0_i32 = arith.constant 0 : i32
    return %arg0, %arg1 : i32, i32
  }
}

</mosaic_0001>

<llo_original>
// kernel: tpu_custom_call.1
$region0: #{tpu_custom_call.1}
  #allocation0 [shape = 'u32[]', space=smem, size = 0x4, offset = 0x4, fixed_abs, tag = 'smem constant byte address 0x4 - core index']
  #allocation1 [shape = 'u32[144,128]{1,0:T(1,128)}', space=vmem, size = 0x12000, scoped, tag = 'internal scratch']
  %s0 = inlined_call_operand.hbm [shape: f32[8,32], index: 0, kind: input, shape index: {}]
  %s1 = inlined_call_operand.hbm [shape: f32[32,32], index: 1, kind: input, shape index: {}]
  %s2 = inlined_call_operand.vmem [shape: f32[1,32], index: 2, kind: input, shape index: {}]
  %s3 = inlined_call_operand.vmem [shape: f32[8,32], index: 3, kind: input, shape index: {}]
  %s4 = inlined_call_operand.hbm [shape: f32[8,32], index: 4, kind: output, shape index: {}]
  %s5 = sld [smem:[#allocation0]]
  $region38: #{tpu_custom_call.1} parent=0
    _
  %s7 = ssub.s32 1, %s5
  %s8 = scalar_select 0, %s7, %s5
  $region1: #{tpu_custom_call.1} parent=0
    #allocation2 [shape = 'u8[4096]{0}', space=vmem, size = 0x1000, scoped, tag = 'input window, operand 0, single buffered']
    #allocation3 [shape = 's32[1]{0}', space=sflag, size = 0x4, scoped, tag = 'scoped memory for tpu_custom_call.1']
    #allocation4 [shape = 's32[1]{0}', space=sflag, size = 0x4, scoped, tag = 'scoped memory for tpu_custom_call.1']
    #allocation5 [shape = 'u8[16384]{0}', space=vmem, size = 0x4000, scoped, tag = 'input window, operand 1, single buffered']
    #allocation6 [shape = 's32[1]{0}', space=sflag, size = 0x4, scoped, tag = 'scoped memory for tpu_custom_call.1']
    #allocation7 [shape = 'u8[4096]{0}', space=vmem, size = 0x1000, scoped, tag = 'output window, operand 0, single buffered']
    %9 = vsyncpa [#allocation3], 0
    %10 = vsyncpa [#allocation6], 0
    %11 = vsyncpa [#allocation4], 0
    // Predicated region
    $region2: #{tpu_custom_call.1} parent=1 // pred_check
      _
    $region3: #{tpu_custom_call.1} parent=1 // pred_check_branch
      %13 = sbr.rel (0) target = $region5
    $region4: #{tpu_custom_call.1} parent=1 // pred_region
      %s15 = ssub.s32 128, 128
      %16 = vsyncadd [#allocation3], %s15
      %s18 = sshll.u32 [#allocation2], 4
      %s19 = int_to_ptr.vmem [resolvable:$true] %s18
      %21 = dma.hbm_to_vmem [thread:$0]  %s0, 128, %s19, [#allocation3]
    $region5: #{tpu_custom_call.1} parent=1 // pred_fallthru
      _
    // Predicated region
    $region6: #{tpu_custom_call.1} parent=1 // pred_check
      _
    $region7: #{tpu_custom_call.1} parent=1 // pred_check_branch
      %23 = sbr.rel (0) target = $region9
    $region8: #{tpu_custom_call.1} parent=1 // pred_region
      %s25 = ssub.s32 512, 512
      %26 = vsyncadd [#allocation6], %s25
      %s27 = sshll.u32 [#allocation5], 4
      %s28 = int_to_ptr.vmem [resolvable:$true] %s27
      %33 = dma.hbm_to_vmem [thread:$0]  %s1, 512, %s28, [#allocation6], 128, 128, 8
    $region9: #{tpu_custom_call.1} parent=1 // pred_fallthru
      _
    // Predicated region
    $region10: #{tpu_custom_call.1} parent=1 // pred_check
      _
    $region11: #{tpu_custom_call.1} parent=1 // pred_check_branch
      %35 = sbr.rel (0) target = $region13
    $region12: #{tpu_custom_call.1} parent=1 // pred_region
      _
    $region13: #{tpu_custom_call.1} parent=1 // pred_fallthru
      _
    // Predicated region
    $region14: #{tpu_custom_call.1} parent=1 // pred_check
      _
    $region15: #{tpu_custom_call.1} parent=1 // pred_check_branch
      %37 = sbr.rel (0) target = $region17
    $region16: #{tpu_custom_call.1} parent=1 // pred_region
      _
    $region17: #{tpu_custom_call.1} parent=1 // pred_fallthru
      _
    // Predicated region
    $region18: #{tpu_custom_call.1} parent=1 // pred_check
      _
    $region19: #{tpu_custom_call.1} parent=1 // pred_check_branch
      %39 = sbr.rel (0) target = $region21
    $region20: #{tpu_custom_call.1} parent=1 // pred_region
      %40 = dma.done [#allocation3], 128
    $region21: #{tpu_custom_call.1} parent=1 // pred_fallthru
      _
    // Predicated region
    $region22: #{tpu_custom_call.1} parent=1 // pred_check
      _
    $region23: #{tpu_custom_call.1} parent=1 // pred_check_branch
      %42 = sbr.rel (0) target = $region25
    $region24: #{tpu_custom_call.1} parent=1 // pred_region
      %43 = dma.done [#allocation6], 512
    $region25: #{tpu_custom_call.1} parent=1 // pred_fallthru
      _
    %p44 = scmp.eq.s32.totalorder 0, 0
    // Predicated region
    $region26: #{tpu_custom_call.1} parent=1 // pred_check
      %p45 = pneg %p44
    $region27: #{tpu_custom_call.1} parent=1 // pred_check_branch
      %47 = sbr.rel (%p45) target = $region29
    $region28: #{tpu_custom_call.1} parent=1 // pred_region
      %v48 = vld [vmem:[%s2] sm:$0x1]
      %v49 = vld [vmem:[%s3] sm:$0xff]
      %v51 = vlaneseq
      %v52 = vshrl.u32 %v51, 7
      %v53 = vsub.s32 0, %v52
      %v54 = vrot.slane %v48, %v53
      %v56 = vadd.f32 %v54, %v49
      %vm57 = vcmask 261120
      %58 = vst.msk [vmem:[#allocation7] sm:$0xff] %vm57, %v56
    $region29: #{tpu_custom_call.1} parent=1 // pred_fallthru
      _
    %v59 = vld [vmem:[#allocation7] sm:$0xff]
    %v60 = vld [vmem:[#allocation2] sm:$0xff]
    %v61 = vld [vmem:[#allocation5] sm:$0xff]
    %v62 = vld [vmem:[#allocation5 + $0x8] sm:$0xff]
    %v63 = vld [vmem:[#allocation5 + $0x10] sm:$0xff]
    %v64 = vld [vmem:[#allocation5 + $0x18] sm:$0xff]
    %vm65 = vcmask 261120
    %v67 = vsel %vm65, %v60, 0
    %v70 = vsel %vm65, %v61, 0
    %v73 = vsel %vm65, %v62, 0
    %v76 = vsel %vm65, %v63, 0
    %v79 = vsel %vm65, %v64, 0
    %81 = vmatprep.subr.mxu0 0.0
    %82 = vmatpush1.xpose.msra.mxu0 %v70
    %83 = vmatprep.subr.mxu0 0.0
    %84 = vmatpush1.xpose.msra.mxu0 %v73
    %85 = vmatprep.subr.mxu0 0.0
    %86 = vmatpush1.xpose.msra.mxu0 %v76
    %87 = vmatprep.subr.mxu0 0.0
    %88 = vmatpush1.xpose.msra.mxu0 %v79
    %89 = vmatprep.subr.mxu0 0.0
    %90 = vmatpush1.xpose.msra.mxu0 0.0
    %91 = vmatprep.subr.mxu0 0.0
    %92 = vmatpush1.xpose.msra.mxu0 0.0
    %93 = vmatprep.subr.mxu0 0.0
    %94 = vmatpush1.xpose.msra.mxu0 0.0
    %95 = vmatprep.subr.mxu0 0.0
    %96 = vmatpush1.xpose.msra.mxu0 0.0
    %97 = vmatprep.subr.mxu0 0.0
    %98 = vmatpush1.xpose.msra.mxu0 0.0
    %99 = vmatprep.subr.mxu0 0.0
    %100 = vmatpush1.xpose.msra.mxu0 0.0
    %101 = vmatprep.subr.mxu0 0.0
    %102 = vmatpush1.xpose.msra.mxu0 0.0
    %103 = vmatprep.subr.mxu0 0.0
    %104 = vmatpush1.xpose.msra.mxu0 0.0
    %105 = vmatprep.subr.mxu0 0.0
    %106 = vmatpush1.xpose.msra.mxu0 0.0
    %107 = vmatprep.subr.mxu0 0.0
    %108 = vmatpush1.xpose.msra.mxu0 0.0
    %109 = vmatprep.subr.mxu0 0.0
    %110 = vmatpush1.xpose.msra.mxu0 0.0
    %111 = vmatprep.subr.mxu0 0.0
    %112 = vmatpush1.xpose.msra.mxu0 0.0
    %113 = vmatprep.subr.mxu0 0.0
    %114 = vmatpush1.xpose.msra.mxu0 0.0
    %115 = vmatprep.subr.mxu0 0.0
    %116 = vmatpush1.xpose.msra.mxu0 0.0
    %117 = vmatprep.subr.mxu0 0.0
    %118 = vmatpush1.xpose.msra.mxu0 0.0
    %119 = vmatprep.subr.mxu0 0.0
    %120 = vmatpush1.xpose.msra.mxu0 0.0
    %121 = vmatprep.subr.mxu0 0.0
    %122 = vmatpush1.xpose.msra.mxu0 0.0
    %123 = vmatprep.subr.mxu0 0.0
    %124 = vmatpush1.xpose.msra.mxu0 0.0
    %125 = vmatprep.subr.mxu0 0.0
    %126 = vmatpush1.xpose.msra.mxu0 0.0
    %127 = vmatprep.subr.mxu0 0.0
    %128 = vmatpush1.xpose.msra.mxu0 0.0
    %129 = vmatprep.subr.mxu0 0.0
    %130 = vmatpush1.xpose.msra.mxu0 0.0
    %131 = vmatprep.subr.mxu0 0.0
    %132 = vmatpush1.xpose.msra.mxu0 0.0
    %133 = vmatprep.subr.mxu0 0.0
    %134 = vmatpush1.xpose.msra.mxu0 0.0
    %135 = vmatprep.subr.mxu0 0.0
    %136 = vmatpush1.xpose.msra.mxu0 0.0
    %137 = vmatprep.subr.mxu0 0.0
    %138 = vmatpush1.xpose.msra.mxu0 0.0
    %139 = vmatprep.subr.mxu0 0.0
    %140 = vmatpush1.xpose.msra.mxu0 0.0
    %141 = vmatprep.subr.mxu0 0.0
    %142 = vmatpush1.xpose.msra.mxu0 0.0
    %143 = vmatprep.subr.mxu0 0.0
    %144 = vmatpush1.xpose.msra.mxu0 0.0
    %145 = vmatprep.mubr.f32.mxu0 0.0
    %146 = vmatmul.mubr.f32.gmra.mrb[0].mxu0 %v67
    %v147 = vpop.f32.mrb[0].mxu0
    %v148 = vadd.f32 0.0, %v147
    %v149 = vpop.f32.mrb[0].mxu0
    %150 = vdwg.mxu0
    %v151 = vadd.f32 %v59, %v148
    %152 = vst.msk [vmem:[#allocation7] sm:$0xff] %vm65, %v151
    // Predicated region
    $region30: #{tpu_custom_call.1} parent=1 // pred_check
      _
    $region31: #{tpu_custom_call.1} parent=1 // pred_check_branch
      %154 = sbr.rel (0) target = $region33
    $region32: #{tpu_custom_call.1} parent=1 // pred_region
      %s156 = ssub.s32 128, 128
      %157 = vsyncadd [#allocation4], %s156
      %s159 = sshll.u32 [#allocation7], 4
      %s160 = int_to_ptr.vmem [resolvable:$true] %s159
      %162 = dma.vmem_to_hbm [thread:$0]  %s160, 128, %s4, [#allocation4]
    $region33: #{tpu_custom_call.1} parent=1 // pred_fallthru
      _
    // Predicated region
    $region34: #{tpu_custom_call.1} parent=1 // pred_check
      _
    $region35: #{tpu_custom_call.1} parent=1 // pred_check_branch
      %164 = sbr.rel (0) target = $region37
    $region36: #{tpu_custom_call.1} parent=1 // pred_region
      %165 = dma.done [#allocation4], 128
    $region37: #{tpu_custom_call.1} parent=1 // pred_fallthru
      _
    %166 = vsyncpa [#allocation3], 1
    %167 = vsyncpa [#allocation6], 1
    %168 = vsyncpa [#allocation4], 1

</llo_original>
